<compile_context>
chip_gen: v5e
topology: v5e:2x2
jax: 0.10.0
libtpu: 0.0.40
codegen_flags: <defaults>
</compile_context>

<pallas_src>
import functools

import jax
import jax.numpy as jnp
import numpy as np
from jax.experimental import pallas as pl
from jax.experimental.pallas import tpu as pltpu


def st_residual_kernel(x_ref, wtcn_ref, btcn_ref, weff_ref, beff_ref, o_ref,
                       *, dilation, c_int):
    nb, seq_len, c_in = x_ref.shape
    l_out = seq_len - dilation

    x = x_ref[...]                                          # (nb, L, C_in)

    # --- GatedTCN: one fused MXU call for both taps of filter + gate convs ---
    # Columns of wtcn: [wf0 | wg0 | wf1 | wg1].
    y = jnp.dot(x.reshape(nb * seq_len, c_in), wtcn_ref[...],
                preferred_element_type=jnp.float32)
    y = y.reshape(nb, seq_len, 4 * c_int)                   # (nb, L, 4*C_int)

    # Combine the dilated k=2 taps on the matmul results (aligned MXU operands).
    pre = (y[:, :l_out, : 2 * c_int]                        # tap at t
           + y[:, dilation:, 2 * c_int:]                    # tap at t + dilation
           + btcn_ref[...])                                 # (1, 2*C_int) bcast
    h = jnp.tanh(pre[..., :c_int]) * jax.nn.sigmoid(pre[..., c_int:])

    # --- DiffusionConv.id_linear folded with (x + skip_linear(x)) ---
    out = (jnp.dot(h.reshape(nb * l_out, c_int), weff_ref[...],
                   preferred_element_type=jnp.float32)
           + beff_ref[...])
    o_ref[...] = out.reshape(nb, l_out, -1).astype(o_ref.dtype)


def st_residual_forward(x_ncl, params, *, dilation=1, block_n=None):
    """x_ncl: (N, C_in, L) like the PyTorch module. Returns (N, C_out, L - dilation)."""
    N, C_in, L = x_ncl.shape
    if L <= dilation:
        raise ValueError(f"sequence length {L} must exceed dilation {dilation} "
                         "(kernel_size=2)")
    C_int = params["wf0"].shape[1]
    C_out = params["wid"].shape[1]
    L_out = L - dilation
    dtype = x_ncl.dtype

    # ---- wrapper-side weight packing / algebraic folding (one-time) ----
    w_tcn = jnp.concatenate(
        [params["wf0"], params["wg0"], params["wf1"], params["wg1"]], axis=1)
    b_tcn = jnp.concatenate([params["bf"], params["bg"]], axis=1)
    # out = g + g @ wsk + bsk, g = h @ wid + bid
    #     = h @ (wid @ (I + wsk)) + (bid @ (I + wsk) + bsk)
    m = jnp.eye(C_out, dtype=params["wsk"].dtype) + params["wsk"]
    w_eff = params["wid"] @ m
    b_eff = params["bid"] @ m + params["bsk"]

    # ---- batch tiling: many batch rows per grid step; keep grid >= 2 when
    #      possible so the parallel axis can be sharded across TensorCores ----
    if block_n is None:
        block_n = N if N == 1 else min(8, (N + 1) // 2)
    n_blocks = -(-N // block_n)
    n_pad = n_blocks * block_n

    x = jnp.transpose(x_ncl, (0, 2, 1))                     # (N, L, C_in)
    if n_pad != N:
        x = jnp.pad(x, ((0, n_pad - N), (0, 0), (0, 0)))

    kernel = functools.partial(st_residual_kernel, dilation=dilation, c_int=C_int)

    out_nlc = pl.pallas_call(
        kernel,
        out_shape=jax.ShapeDtypeStruct((n_pad, L_out, C_out), dtype),
        grid=(n_blocks,),
        in_specs=[
            pl.BlockSpec((block_n, L, C_in), lambda n: (n, 0, 0)),
            pl.BlockSpec((C_in, 4 * C_int), lambda n: (0, 0)),
            pl.BlockSpec((1, 2 * C_int), lambda n: (0, 0)),
            pl.BlockSpec((C_int, C_out), lambda n: (0, 0)),
            pl.BlockSpec((1, C_out), lambda n: (0, 0)),
        ],
        out_specs=pl.BlockSpec((block_n, L_out, C_out), lambda n: (n, 0, 0)),
        compiler_params=pltpu.CompilerParams(dimension_semantics=("parallel",)),
    )(x, w_tcn, b_tcn, w_eff, b_eff)

    return jnp.transpose(out_nlc[:N], (0, 2, 1))            # back to (N, C_out, L_out)


def reference_forward(x_ncl, p, *, dilation=1):
    """Pure-JAX reference matching the PyTorch forward semantics (unfused)."""
    x = jnp.transpose(x_ncl, (0, 2, 1))
    L = x.shape[1]
    L_out = L - dilation
    x0 = x[:, :L_out, :]
    x1 = x[:, dilation:dilation + L_out, :]
    filt = x0 @ p["wf0"] + x1 @ p["wf1"] + p["bf"]
    gate = x0 @ p["wg0"] + x1 @ p["wg1"] + p["bg"]
    h = jnp.tanh(filt) * jax.nn.sigmoid(gate)
    g = h @ p["wid"] + p["bid"]
    out = g + g @ p["wsk"] + p["bsk"]
    return jnp.transpose(out, (0, 2, 1))


def init_params(key, c_in, c_int, c_out):
    # Deterministic synthetic initialisation; weights stored in (in, out)
    # orientation (i.e. already transposed relative to PyTorch's (out, in)).
    ks = jax.random.split(key, 10)
    s = 0.2
    return {
        # GatedTCN filter_conv / gate_conv: Conv1d(c_in, c_int, k=2) taps 0 and 1.
        "wf0": s * jax.random.normal(ks[0], (c_in, c_int), jnp.float32),
        "wf1": s * jax.random.normal(ks[1], (c_in, c_int), jnp.float32),
        "bf":  s * jax.random.normal(ks[2], (1, c_int), jnp.float32),
        "wg0": s * jax.random.normal(ks[3], (c_in, c_int), jnp.float32),
        "wg1": s * jax.random.normal(ks[4], (c_in, c_int), jnp.float32),
        "bg":  s * jax.random.normal(ks[5], (1, c_int), jnp.float32),
        # DiffusionConv.id_linear: Linear(c_int, c_out)
        "wid": s * jax.random.normal(ks[6], (c_int, c_out), jnp.float32),
        "bid": s * jax.random.normal(ks[7], (1, c_out), jnp.float32),
        # skip_linear: Linear(c_in, c_out)  (c_in == c_out required by aliasing)
        "wsk": s * jax.random.normal(ks[8], (c_out, c_out), jnp.float32),
        "bsk": s * jax.random.normal(ks[9], (1, c_out), jnp.float32),
    }


if __name__ == "__main__":
    # C_OUT must equal C_IN (Data.x aliasing in the PyTorch module, see header).
    N, C_IN, C_INT, C_OUT, L = 8, 32, 64, 32, 32
    DILATION = 2

    key = jax.random.PRNGKey(0)
    kx, kp = jax.random.split(key)
    x = jax.random.normal(kx, (N, C_IN, L), jnp.float32)    # PyTorch (N, C, L) layout
    params = init_params(kp, C_IN, C_INT, C_OUT)

    out = jax.block_until_ready(st_residual_forward(x, params, dilation=DILATION))
    ref = jax.block_until_ready(reference_forward(x, params, dilation=DILATION))

    assert out.shape == (N, C_OUT, L - DILATION), out.shape
    # rtol/atol account for the (exact-in-algebra) id/skip weight fold, which
    # reassociates f32 sums relative to the unfused reference.
    np.testing.assert_allclose(np.asarray(out), np.asarray(ref), rtol=1e-4, atol=1e-4)

    print("KERNEL_OK")
</pallas_src>

<mosaic_0001>
module attributes {stable_mosaic.version = 11 : i64} {
  func.func @st_residual_kernel(%arg0: i32, %arg1: memref<4x32x32xf32, #tpu.memory_space<vmem>>, %arg2: memref<32x256xf32, #tpu.memory_space<vmem>>, %arg3: memref<1x128xf32, #tpu.memory_space<vmem>>, %arg4: memref<64x32xf32, #tpu.memory_space<vmem>>, %arg5: memref<1x32xf32, #tpu.memory_space<vmem>>, %arg6: memref<4x30x32xf32, #tpu.memory_space<vmem>>) attributes {dimension_semantics = [#tpu.dimension_semantics<parallel>], iteration_bounds = array<i64: 2>, scalar_prefetch = 0 : i64, scratch_operands = 0 : i64, tpu.core_type = #tpu.core_type<tc>, window_params = [{transform_indices = @transform_0, window_bounds = array<i64: 4, 32, 32>}, {pipeline_mode = #tpu.pipeline_mode<synchronous>, transform_indices = @transform_1, window_bounds = array<i64: 32, 256>}, {pipeline_mode = #tpu.pipeline_mode<synchronous>, transform_indices = @transform_2, window_bounds = array<i64: 1, 128>}, {pipeline_mode = #tpu.pipeline_mode<synchronous>, transform_indices = @transform_3, window_bounds = array<i64: 64, 32>}, {pipeline_mode = #tpu.pipeline_mode<synchronous>, transform_indices = @transform_4, window_bounds = array<i64: 1, 32>}, {transform_indices = @transform_5, window_bounds = array<i64: 4, 30, 32>}]} {
    %c0 = arith.constant 0 : index
    %c0_0 = arith.constant 0 : index
    %c0_1 = arith.constant 0 : index
    %0 = vector.load %arg1[%c0, %c0_0, %c0_1] : memref<4x32x32xf32, #tpu.memory_space<vmem>>, vector<4x32x32xf32>
    %1 = vector.shape_cast %0 : vector<4x32x32xf32> to vector<128x32xf32>
    %c0_2 = arith.constant 0 : index
    %c0_3 = arith.constant 0 : index
    %2 = vector.load %arg2[%c0_2, %c0_3] : memref<32x256xf32, #tpu.memory_space<vmem>>, vector<32x256xf32>
    %cst = arith.constant dense<0.000000e+00> : vector<128x256xf32>
    %3 = tpu.matmul %1, %2, %cst {dimension_numbers = #tpu.dot_dimension_numbers<[1], [0], [0], [1], [0, 0, 1, 1], [], []>} : vector<128x32xf32>, vector<32x256xf32>, vector<128x256xf32> -> vector<128x256xf32>
    %4 = vector.shape_cast %3 : vector<128x256xf32> to vector<4x32x256xf32>
    %5 = vector.extract_strided_slice %4 {offsets = [0, 0, 0], sizes = [4, 30, 128], strides = [1, 1, 1]} : vector<4x32x256xf32> to vector<4x30x128xf32>
    %6 = vector.extract_strided_slice %4 {offsets = [0, 2, 128], sizes = [4, 30, 128], strides = [1, 1, 1]} : vector<4x32x256xf32> to vector<4x30x128xf32>
    %7 = arith.addf %5, %6 : vector<4x30x128xf32>
    %c0_4 = arith.constant 0 : index
    %c0_5 = arith.constant 0 : index
    %8 = vector.load %arg3[%c0_4, %c0_5] : memref<1x128xf32, #tpu.memory_space<vmem>>, vector<1x128xf32>
    %9 = vector.shape_cast %8 : vector<1x128xf32> to vector<1x1x128xf32>
    %10 = vector.broadcast %9 : vector<1x1x128xf32> to vector<4x30x128xf32>
    %11 = arith.addf %7, %10 : vector<4x30x128xf32>
    %12 = vector.extract_strided_slice %11 {offsets = [0, 0, 0], sizes = [4, 30, 64], strides = [1, 1, 1]} : vector<4x30x128xf32> to vector<4x30x64xf32>
    %13 = math.tanh %12 : vector<4x30x64xf32>
    %14 = vector.extract_strided_slice %11 {offsets = [0, 0, 64], sizes = [4, 30, 64], strides = [1, 1, 1]} : vector<4x30x128xf32> to vector<4x30x64xf32>
    %15 = arith.negf %14 : vector<4x30x64xf32>
    %16 = math.exp %15 : vector<4x30x64xf32>
    %cst_6 = arith.constant 1.000000e+00 : f32
    %17 = vector.broadcast %cst_6 : f32 to vector<4x30x64xf32>
    %18 = arith.addf %17, %16 : vector<4x30x64xf32>
    %19 = arith.divf %17, %18 : vector<4x30x64xf32>
    %20 = arith.mulf %13, %19 : vector<4x30x64xf32>
    %21 = vector.shape_cast %20 : vector<4x30x64xf32> to vector<120x64xf32>
    %c0_7 = arith.constant 0 : index
    %c0_8 = arith.constant 0 : index
    %22 = vector.load %arg4[%c0_7, %c0_8] : memref<64x32xf32, #tpu.memory_space<vmem>>, vector<64x32xf32>
    %cst_9 = arith.constant dense<0.000000e+00> : vector<120x32xf32>
    %23 = tpu.matmul %21, %22, %cst_9 {dimension_numbers = #tpu.dot_dimension_numbers<[1], [0], [0], [1], [0, 0, 1, 1], [], []>} : vector<120x64xf32>, vector<64x32xf32>, vector<120x32xf32> -> vector<120x32xf32>
    %c0_10 = arith.constant 0 : index
    %c0_11 = arith.constant 0 : index
    %24 = vector.load %arg5[%c0_10, %c0_11] : memref<1x32xf32, #tpu.memory_space<vmem>>, vector<1x32xf32>
    %25 = vector.broadcast %24 : vector<1x32xf32> to vector<120x32xf32>
    %26 = arith.addf %23, %25 : vector<120x32xf32>
    %27 = vector.shape_cast %26 : vector<120x32xf32> to vector<4x30x32xf32>
    %c0_12 = arith.constant 0 : index
    %c0_13 = arith.constant 0 : index
    %c0_14 = arith.constant 0 : index
    %28 = vector.load %arg6[%c0_12, %c0_13, %c0_14] : memref<4x30x32xf32, #tpu.memory_space<vmem>>, vector<4x30x32xf32>
    tpu.vector_store %arg6[%c0_12, %c0_13, %c0_14], %27 {strides = array<i32>} : memref<4x30x32xf32, #tpu.memory_space<vmem>>, vector<4x30x32xf32>,
    return
  }
  func.func @transform_0(%arg0: i32) -> (i32, i32, i32) {
    %c0_i32 = arith.constant 0 : i32
    %c0_i32_0 = arith.constant 0 : i32
    %c0_i32_1 = arith.constant 0 : i32
    return %arg0, %c0_i32, %c0_i32_0 : i32, i32, i32
  }
  func.func @transform_1(%arg0: i32) -> (i32, i32) {
    %c0_i32 = arith.constant 0 : i32
    %c0_i32_0 = arith.constant 0 : i32
    %c0_i32_1 = arith.constant 0 : i32
    return %c0_i32, %c0_i32_0 : i32, i32
  }
  func.func @transform_2(%arg0: i32) -> (i32, i32) {
    %c0_i32 = arith.constant 0 : i32
    %c0_i32_0 = arith.constant 0 : i32
    %c0_i32_1 = arith.constant 0 : i32
    return %c0_i32, %c0_i32_0 : i32, i32
  }
  func.func @transform_3(%arg0: i32) -> (i32, i32) {
    %c0_i32 = arith.constant 0 : i32
    %c0_i32_0 = arith.constant 0 : i32
    %c0_i32_1 = arith.constant 0 : i32
    return %c0_i32, %c0_i32_0 : i32, i32
  }
  func.func @transform_4(%arg0: i32) -> (i32, i32) {
    %c0_i32 = arith.constant 0 : i32
    %c0_i32_0 = arith.constant 0 : i32
    %c0_i32_1 = arith.constant 0 : i32
    return %c0_i32, %c0_i32_0 : i32, i32
  }
  func.func @transform_5(%arg0: i32) -> (i32, i32, i32) {
    %c0_i32 = arith.constant 0 : i32
    %c0_i32_0 = arith.constant 0 : i32
    %c0_i32_1 = arith.constant 0 : i32
    return %arg0, %c0_i32, %c0_i32_0 : i32, i32, i32
  }
}

</mosaic_0001>

<llo_original>
// kernel: tpu_custom_call.1
$region0: #{tpu_custom_call.1}
  #allocation0 [shape = 'u32[]', space=smem, size = 0x4, offset = 0x4, fixed_abs, tag = 'smem constant byte address 0x4 - core index']
  #allocation1 [shape = 'u32[72,128]{1,0:T(1,128)}', space=vmem, size = 0x9000, scoped, tag = 'internal scratch']
  %s0 = inlined_call_operand.hbm [shape: f32[8,32,32], index: 0, kind: input, shape index: {}]
  %s1 = inlined_call_operand.vmem [shape: f32[32,256], index: 1, kind: input, shape index: {}]
  %s2 = inlined_call_operand.vmem [shape: f32[1,128], index: 2, kind: input, shape index: {}]
  %s3 = inlined_call_operand.vmem [shape: f32[64,32], index: 3, kind: input, shape index: {}]
  %s4 = inlined_call_operand.vmem [shape: f32[1,32], index: 4, kind: input, shape index: {}]
  %s5 = inlined_call_operand.vmem [shape: f32[8,30,32], index: 5, kind: output, shape index: {}]
  %s6 = sld [smem:[#allocation0]]
  $region57: #{tpu_custom_call.1} parent=0
    _
  %s8 = ssub.s32 1, %s6
  %s9 = scalar_select 0, %s8, %s6
  $region1: #{tpu_custom_call.1} parent=0
    #allocation2 [shape = 'u8[131072]{0}', space=vmem, size = 0x20000, scoped, tag = 'input window, operand 0']
    #allocation3 [shape = 's32[2]{0}', space=sflag, size = 0x8, scoped, tag = 'scoped memory for tpu_custom_call.1']
    %10 = vsyncpa [#allocation3], 0
    %s11 = scalar_lea.sflag [#allocation3], 1
    %12 = vsyncpa %s11, 0
    loop: start=0, step=1, limit=4
    $region2: #{tpu_custom_call.1} parent=1 // loop_pre_header
      _
    $region3: #{tpu_custom_call.1} parent=1 // loop_header
      %s14 = sphi 0, %s18
      %p15 = scmp.ge.s32.totalorder %s14, 4
      %s24 = sphi 0, %s26
      %s27 = sphi 0, %s24
      %s28 = sphi 0, %s27
      %s44 = sphi 0, %s28
      %s48 = sphi 0, %s48
      %s50 = sphi 0, %s48
      %s51 = sphi 0, %s50
      %s65 = sphi 0, %s51
      %s69 = sphi 0, %s69
      %s71 = sphi 0, %s69
      %s72 = sphi 0, %s71
      %s86 = sphi 0, %s72
      %s90 = sphi 0, %s90
      %s92 = sphi 0, %s90
      %s93 = sphi 0, %s92
      %s107 = sphi 0, %s93
      %s111 = sphi 0, %s111
      %s113 = sphi 0, %s111
      %s114 = sphi 0, %s113
      %s128 = sphi 0, %s114
      %s134 = sphi 0, %s136
      %s137 = sphi 0, %s134
      %s138 = sphi 0, %s137
      %s154 = sphi 0, %s138
    $region4: #{tpu_custom_call.1} parent=1 // loop_header_branch
      %17 = sbr.rel (%p15) target = $region8
    $region5: #{tpu_custom_call.1} parent=1 // loop_body
      %s19 = ssub.s32 %s14, 1
      %s20 = ssub.s32 %s14, 2
      %s21 = sadd.s32 %s14, 1
      %s22 = ssub.s32 %s14, %s21
      %p23 = scmp.eq.s32.totalorder %s22, 0
      %s25 = sadd.s32 %s24, 1
      %s26 = scalar_select %p23, %s24, %s25
      %p29 = pneg %p23
      %p30 = scmp.eq.s32.totalorder %s14, 1
      %p31 = por %p29, %p30
      %p32 = scmp.ne.s32.totalorder %s24, %s27
      %p33 = scmp.eq.s32.totalorder %s14, 0
      %p34 = por %p32, %p33
      %p35 = scmp.ne.s32.totalorder %s24, %s27
      %p36 = scmp.eq.s32.totalorder %s19, 1
      %p37 = por %p35, %p36
      %p38 = scmp.ne.s32.totalorder %s27, %s28
      %p39 = scmp.eq.s32.totalorder %s19, 0
      %p40 = por %p38, %p39
      %p41 = scmp.ne.s32.totalorder %s27, %s28
      %p42 = scmp.eq.s32.totalorder %s20, 1
      %p43 = por %p41, %p42
      %p45 = scmp.ne.s32.totalorder %s28, %s44
      %p46 = scmp.eq.s32.totalorder %s20, 0
      %p47 = por %p45, %p46
      %s49 = sadd.s32 %s48, 1
      %p52 = scmp.eq.s32.totalorder %s14, 1
      %p53 = scmp.ne.s32.totalorder %s48, %s50
      %p54 = scmp.eq.s32.totalorder %s14, 0
      %p55 = por %p53, %p54
      %p56 = scmp.ne.s32.totalorder %s48, %s50
      %p57 = scmp.eq.s32.totalorder %s19, 1
      %p58 = por %p56, %p57
      %p59 = scmp.ne.s32.totalorder %s50, %s51
      %p60 = scmp.eq.s32.totalorder %s19, 0
      %p61 = por %p59, %p60
      %p62 = scmp.ne.s32.totalorder %s50, %s51
      %p63 = scmp.eq.s32.totalorder %s20, 1
      %p64 = por %p62, %p63
      %p66 = scmp.ne.s32.totalorder %s51, %s65
      %p67 = scmp.eq.s32.totalorder %s20, 0
      %p68 = por %p66, %p67
      %s70 = sadd.s32 %s69, 1
      %p73 = scmp.eq.s32.totalorder %s14, 1
      %p74 = scmp.ne.s32.totalorder %s69, %s71
      %p75 = scmp.eq.s32.totalorder %s14, 0
      %p76 = por %p74, %p75
      %p77 = scmp.ne.s32.totalorder %s69, %s71
      %p78 = scmp.eq.s32.totalorder %s19, 1
      %p79 = por %p77, %p78
      %p80 = scmp.ne.s32.totalorder %s71, %s72
      %p81 = scmp.eq.s32.totalorder %s19, 0
      %p82 = por %p80, %p81
      %p83 = scmp.ne.s32.totalorder %s71, %s72
      %p84 = scmp.eq.s32.totalorder %s20, 1
      %p85 = por %p83, %p84
      %p87 = scmp.ne.s32.totalorder %s72, %s86
      %p88 = scmp.eq.s32.totalorder %s20, 0
      %p89 = por %p87, %p88
      %s91 = sadd.s32 %s90, 1
      %p94 = scmp.eq.s32.totalorder %s14, 1
      %p95 = scmp.ne.s32.totalorder %s90, %s92
      %p96 = scmp.eq.s32.totalorder %s14, 0
      %p97 = por %p95, %p96
      %p98 = scmp.ne.s32.totalorder %s90, %s92
      %p99 = scmp.eq.s32.totalorder %s19, 1
      %p100 = por %p98, %p99
      %p101 = scmp.ne.s32.totalorder %s92, %s93
      %p102 = scmp.eq.s32.totalorder %s19, 0
      %p103 = por %p101, %p102
      %p104 = scmp.ne.s32.totalorder %s92, %s93
      %p105 = scmp.eq.s32.totalorder %s20, 1
      %p106 = por %p104, %p105
      %p108 = scmp.ne.s32.totalorder %s93, %s107
      %p109 = scmp.eq.s32.totalorder %s20, 0
      %p110 = por %p108, %p109
      %s112 = sadd.s32 %s111, 1
      %p115 = scmp.eq.s32.totalorder %s14, 1
      %p116 = scmp.ne.s32.totalorder %s111, %s113
      %p117 = scmp.eq.s32.totalorder %s14, 0
      %p118 = por %p116, %p117
      %p119 = scmp.ne.s32.totalorder %s111, %s113
      %p120 = scmp.eq.s32.totalorder %s19, 1
      %p121 = por %p119, %p120
      %p122 = scmp.ne.s32.totalorder %s113, %s114
      %p123 = scmp.eq.s32.totalorder %s19, 0
      %p124 = por %p122, %p123
      %p125 = scmp.ne.s32.totalorder %s113, %s114
      %p126 = scmp.eq.s32.totalorder %s20, 1
      %p127 = por %p125, %p126
      %p129 = scmp.ne.s32.totalorder %s114, %s128
      %p130 = scmp.eq.s32.totalorder %s20, 0
      %p131 = por %p129, %p130
      %s132 = ssub.s32 %s14, %s21
      %p133 = scmp.eq.s32.totalorder %s132, 0
      %s135 = sadd.s32 %s134, 1
      %s136 = scalar_select %p133, %s134, %s135
      %p139 = pneg %p133
      %p140 = scmp.eq.s32.totalorder %s14, 1
      %p141 = por %p139, %p140
      %p142 = scmp.ne.s32.totalorder %s134, %s137
      %p143 = scmp.eq.s32.totalorder %s14, 0
      %p144 = por %p142, %p143
      %p145 = scmp.ne.s32.totalorder %s134, %s137
      %p146 = scmp.eq.s32.totalorder %s19, 1
      %p147 = por %p145, %p146
      %p148 = scmp.ne.s32.totalorder %s137, %s138
      %p149 = scmp.eq.s32.totalorder %s19, 0
      %p150 = por %p148, %p149
      %p151 = scmp.ne.s32.totalorder %s137, %s138
      %p152 = scmp.eq.s32.totalorder %s20, 1
      %p153 = por %p151, %p152
      %p155 = scmp.ne.s32.totalorder %s138, %s154
      %p156 = scmp.eq.s32.totalorder %s20, 0
      %p157 = por %p155, %p156
      %p158 = scmp.le.s32.totalorder 1, %s14
      %p159 = scmp.lt.s32.totalorder %s14, 3
      %p160 = pnand %p158, %p159
      %p161 = pneg %p160
      // Predicated region
      $region9: #{tpu_custom_call.1} parent=5 // pred_check
        _
      $region10: #{tpu_custom_call.1} parent=5 // pred_check_branch
        %163 = sbr.rel (%p160) target = $region12
      $region11: #{tpu_custom_call.1} parent=5 // pred_region
        %s164 = ssub.s32 %s14, 1
        // Predicated region
        $region13: #{tpu_custom_call.1} parent=11 // pred_check
          %p165 = pneg %p61
        $region14: #{tpu_custom_call.1} parent=11 // pred_check_branch
          %167 = sbr.rel (%p165) target = $region16
        $region15: #{tpu_custom_call.1} parent=11 // pred_region
          _
        $region16: #{tpu_custom_call.1} parent=11 // pred_fallthru
          _
        // Predicated region
        $region17: #{tpu_custom_call.1} parent=11 // pred_check
          %p168 = pneg %p82
        $region18: #{tpu_custom_call.1} parent=11 // pred_check_branch
          %170 = sbr.rel (%p168) target = $region20
        $region19: #{tpu_custom_call.1} parent=11 // pred_region
          _
        $region20: #{tpu_custom_call.1} parent=11 // pred_fallthru
          _
        // Predicated region
        $region21: #{tpu_custom_call.1} parent=11 // pred_check
          %p171 = pneg %p103
        $region22: #{tpu_custom_call.1} parent=11 // pred_check_branch
          %173 = sbr.rel (%p171) target = $region24
        $region23: #{tpu_custom_call.1} parent=11 // pred_region
          _
        $region24: #{tpu_custom_call.1} parent=11 // pred_fallthru
          _
        // Predicated region
        $region25: #{tpu_custom_call.1} parent=11 // pred_check
          %p174 = pneg %p124
        $region26: #{tpu_custom_call.1} parent=11 // pred_check_branch
          %176 = sbr.rel (%p174) target = $region28
        $region27: #{tpu_custom_call.1} parent=11 // pred_region
          _
        $region28: #{tpu_custom_call.1} parent=11 // pred_fallthru
          _
      $region12: #{tpu_custom_call.1} parent=5 // pred_fallthru
        _
      %p177 = scmp.lt.s32.totalorder %s14, 2
      // Predicated region
      $region29: #{tpu_custom_call.1} parent=5 // pred_check
        %p178 = pneg %p177
      $region30: #{tpu_custom_call.1} parent=5 // pred_check_branch
        %180 = sbr.rel (%p178) target = $region32
      $region31: #{tpu_custom_call.1} parent=5 // pred_region
        // Predicated region
        $region33: #{tpu_custom_call.1} parent=31 // pred_check
          %p181 = pneg %p34
        $region34: #{tpu_custom_call.1} parent=31 // pred_check_branch
          %183 = sbr.rel (%p181) target = $region36
        $region35: #{tpu_custom_call.1} parent=31 // pred_region
          %s184 = sand.u32 %s24, 1
          %s185 = scalar_lea.sflag [#allocation3], %s184
          %s186 = sand.u32 %s24, 1
          %s187 = smul.addr %s186, 128
          %s188 = scalar_lea.vmem [#allocation2], %s187
          %s189 = smul.u32 4, %s14
          %191 = vsyncadd %s185, 0
          %s192 = smul.addr %s189, 4
          %s193 = smul.addr %s192, 8
          %s194 = scalar_lea.hbm %s0, %s193
          %s195 = sshll.u32 %s194, 4
          %s196 = int_to_ptr.hbm [resolvable:$true] %s195
          %s197 = sshll.u32 %s188, 4
          %s198 = int_to_ptr.vmem [resolvable:$true] %s197
          %203 = dma.hbm_to_vmem [thread:$0]  %s196, 2048, %s198, %s185, 128, 128, 8
        $region36: #{tpu_custom_call.1} parent=31 // pred_fallthru
          _
      $region32: #{tpu_custom_call.1} parent=5 // pred_fallthru
        _
      %p204 = scmp.le.s32.totalorder 1, %s14
      %p205 = scmp.lt.s32.totalorder %s14, 3
      %p206 = pnand %p204, %p205
      %p207 = pneg %p206
      // Predicated region
      $region37: #{tpu_custom_call.1} parent=5 // pred_check
        _
      $region38: #{tpu_custom_call.1} parent=5 // pred_check_branch
        %209 = sbr.rel (%p206) target = $region40
      $region39: #{tpu_custom_call.1} parent=5 // pred_region
        %s210 = ssub.s32 %s14, 1
        %s211 = sand.u32 %s27, 1
        %s212 = scalar_lea.sflag [#allocation3], %s211
        %s213 = sand.u32 %s27, 1
        %s214 = smul.addr %s213, 128
        %s215 = scalar_lea.vmem [#allocation2], %s214
        // Predicated region
        $region41: #{tpu_custom_call.1} parent=39 // pred_check
          %p216 = pneg %p40
        $region42: #{tpu_custom_call.1} parent=39 // pred_check_branch
          %218 = sbr.rel (%p216) target = $region44
        $region43: #{tpu_custom_call.1} parent=39 // pred_region
          %220 = dma.done %s212, 2048
        $region44: #{tpu_custom_call.1} parent=39 // pred_fallthru
          _
        %s221 = sand.u32 %s27, 1
        %s222 = scalar_lea.sflag [#allocation3], %s221
        %s223 = sand.u32 %s27, 1
        %s224 = smul.addr %s223, 128
        %s225 = scalar_lea.vmem [#allocation2], %s224
        %p226 = pneg %p40
        %p227 = pneg %p37
        %p228 = pneg %p61
        %p229 = pneg %p58
        %p230 = pneg %p82
        %p231 = pneg %p79
        %p232 = pneg %p103
        %p233 = pneg %p100
        %p234 = pneg %p124
        %p235 = pneg %p121
        %p236 = pneg %p150
        %p237 = pneg %p147
        %s238 = smul.u32 4, %s19
        %p239 = scmp.lt.s32.totalorder %s238, 7
        %s240 = scalar_select %p239, %s238, 7
        %s241 = smul.addr %s240, 4
        %s242 = smul.addr %s241, 8
        %s243 = scalar_lea.vmem %s5, %s242
        %s244 = smul.u32 4, %s19
        %s245 = smul.u32 4, %s19
        %p246 = scmp.lt.s32.totalorder %s245, 7
        %s247 = scalar_select %p246, %s245, 7
        %s248 = smul.addr %s247, 4
        %s249 = smul.addr %s248, 8
        %s250 = scalar_lea.vmem %s5, %s249
        %s251 = smul.u32 4, %s19
        %v252 = vld [vmem:[%s215] sm:$0xff]
        %v253 = vld [vmem:[%s215 + $0x8] sm:$0xff]
        %v254 = vld [vmem:[%s215 + $0x10] sm:$0xff]
        %v255 = vld [vmem:[%s215 + $0x18] sm:$0xff]
        %v256 = vld [vmem:[%s215 + $0x20] sm:$0xff]
        %v257 = vld [vmem:[%s215 + $0x28] sm:$0xff]
        %v258 = vld [vmem:[%s215 + $0x30] sm:$0xff]
        %v259 = vld [vmem:[%s215 + $0x38] sm:$0xff]
        %v260 = vld [vmem:[%s215 + $0x40] sm:$0xff]
        %v261 = vld [vmem:[%s215 + $0x48] sm:$0xff]
        %v262 = vld [vmem:[%s215 + $0x50] sm:$0xff]
        %v263 = vld [vmem:[%s215 + $0x58] sm:$0xff]
        %v264 = vld [vmem:[%s215 + $0x60] sm:$0xff]
        %v265 = vld [vmem:[%s215 + $0x68] sm:$0xff]
        %v266 = vld [vmem:[%s215 + $0x70] sm:$0xff]
        %v267 = vld [vmem:[%s215 + $0x78] sm:$0xff]
        %v268 = vld [vmem:[%s1] sm:$0xff]
        %v269 = vld [vmem:[%s1 + $0x8] sm:$0xff]
        %v270 = vld [vmem:[%s1 + $0x10] sm:$0xff]
        %v271 = vld [vmem:[%s1 + $0x18] sm:$0xff]
        %v272 = vld [vmem:[%s1 + $0x20] sm:$0xff]
        %v273 = vld [vmem:[%s1 + $0x28] sm:$0xff]
        %v274 = vld [vmem:[%s1 + $0x30] sm:$0xff]
        %v275 = vld [vmem:[%s1 + $0x38] sm:$0xff]
        %vm276 = vcmask 261120
        %v278 = vsel %vm276, %v252, 0
        %v281 = vsel %vm276, %v253, 0
        %v284 = vsel %vm276, %v254, 0
        %v287 = vsel %vm276, %v255, 0
        %v290 = vsel %vm276, %v256, 0
        %v293 = vsel %vm276, %v257, 0
        %v296 = vsel %vm276, %v258, 0
        %v299 = vsel %vm276, %v259, 0
        %v302 = vsel %vm276, %v260, 0
        %v305 = vsel %vm276, %v261, 0
        %v308 = vsel %vm276, %v262, 0
        %v311 = vsel %vm276, %v263, 0
        %v314 = vsel %vm276, %v264, 0
        %v317 = vsel %vm276, %v265, 0
        %v320 = vsel %vm276, %v266, 0
        %v323 = vsel %vm276, %v267, 0
        %325 = vmatpush.msra.mxu0 0.0
        %326 = vmatpush.msra.mxu0 0.0
        %327 = vmatpush.msra.mxu0 0.0
        %328 = vmatpush.msra.mxu0 0.0
        %329 = vmatpush.msra.mxu0 0.0
        %330 = vmatpush.msra.mxu0 0.0
        %331 = vmatpush.msra.mxu0 0.0
        %332 = vmatpush.msra.mxu0 0.0
        %333 = vmatpush.msra.mxu0 0.0
        %334 = vmatpush.msra.mxu0 0.0
        %335 = vmatpush.msra.mxu0 0.0
        %336 = vmatpush.msra.mxu0 0.0
        %337 = vmatpush.msra.mxu0 %v274
        %338 = vmatpush.msra.mxu0 %v272
        %339 = vmatpush.msra.mxu0 %v270
        %340 = vmatpush.msra.mxu0 %v268
        %341 = vmatmul.f32.gmra.mxu0 %v278
        %v342 = vpop.f32.mrf.mxu0
        %v343 = vadd.f32 0.0, %v342
        %344 = vmatmul.f32.gmra.mxu0 %v281
        %v345 = vpop.f32.mrf.mxu0
        %v346 = vadd.f32 0.0, %v345
        %347 = vmatmul.f32.gmra.mxu0 %v284
        %v348 = vpop.f32.mrf.mxu0
        %v349 = vadd.f32 0.0, %v348
        %350 = vmatmul.f32.gmra.mxu0 %v287
        %v351 = vpop.f32.mrf.mxu0
        %v352 = vadd.f32 0.0, %v351
        %353 = vmatmul.f32.gmra.mxu0 %v290
        %v354 = vpop.f32.mrf.mxu0
        %v355 = vadd.f32 0.0, %v354
        %356 = vmatmul.f32.gmra.mxu0 %v293
        %v357 = vpop.f32.mrf.mxu0
        %v358 = vadd.f32 0.0, %v357
        %359 = vmatmul.f32.gmra.mxu0 %v296
        %v360 = vpop.f32.mrf.mxu0
        %v361 = vadd.f32 0.0, %v360
        %362 = vmatmul.f32.gmra.mxu0 %v299
        %v363 = vpop.f32.mrf.mxu0
        %v364 = vadd.f32 0.0, %v363
        %365 = vmatmul.f32.gmra.mxu0 %v302
        %v366 = vpop.f32.mrf.mxu0
        %v367 = vadd.f32 0.0, %v366
        %368 = vmatmul.f32.gmra.mxu0 %v305
        %v369 = vpop.f32.mrf.mxu0
        %v370 = vadd.f32 0.0, %v369
        %371 = vmatmul.f32.gmra.mxu0 %v308
        %v372 = vpop.f32.mrf.mxu0
        %v373 = vadd.f32 0.0, %v372
        %374 = vmatmul.f32.gmra.mxu0 %v311
        %v375 = vpop.f32.mrf.mxu0
        %v376 = vadd.f32 0.0, %v375
        %377 = vmatmul.f32.gmra.mxu0 %v314
        %v378 = vpop.f32.mrf.mxu0
        %v379 = vadd.f32 0.0, %v378
        %380 = vmatmul.f32.gmra.mxu0 %v317
        %v381 = vpop.f32.mrf.mxu0
        %v382 = vadd.f32 0.0, %v381
        %383 = vmatmul.f32.gmra.mxu0 %v320
        %v384 = vpop.f32.mrf.mxu0
        %v385 = vadd.f32 0.0, %v384
        %386 = vmatmul.f32.gmra.mxu0 %v323
        %v387 = vpop.f32.mrf.mxu0
        %v388 = vadd.f32 0.0, %v387
        %389 = vdwg.mxu0
        %390 = vmatpush.msra.mxu0 0.0
        %391 = vmatpush.msra.mxu0 0.0
        %392 = vmatpush.msra.mxu0 0.0
        %393 = vmatpush.msra.mxu0 0.0
        %394 = vmatpush.msra.mxu0 0.0
        %395 = vmatpush.msra.mxu0 0.0
        %396 = vmatpush.msra.mxu0 0.0
        %397 = vmatpush.msra.mxu0 0.0
        %398 = vmatpush.msra.mxu0 0.0
        %399 = vmatpush.msra.mxu0 0.0
        %400 = vmatpush.msra.mxu0 0.0
        %401 = vmatpush.msra.mxu0 0.0
        %402 = vmatpush.msra.mxu0 %v275
        %403 = vmatpush.msra.mxu0 %v273
        %404 = vmatpush.msra.mxu0 %v271
        %405 = vmatpush.msra.mxu0 %v269
        %406 = vmatmul.f32.gmra.mxu0 %v278
        %v407 = vpop.f32.mrf.mxu0
        %v408 = vadd.f32 0.0, %v407
        %409 = vmatmul.f32.gmra.mxu0 %v281
        %v410 = vpop.f32.mrf.mxu0
        %v411 = vadd.f32 0.0, %v410
        %412 = vmatmul.f32.gmra.mxu0 %v284
        %v413 = vpop.f32.mrf.mxu0
        %v414 = vadd.f32 0.0, %v413
        %415 = vmatmul.f32.gmra.mxu0 %v287
        %v416 = vpop.f32.mrf.mxu0
        %v417 = vadd.f32 0.0, %v416
        %418 = vmatmul.f32.gmra.mxu0 %v290
        %v419 = vpop.f32.mrf.mxu0
        %v420 = vadd.f32 0.0, %v419
        %421 = vmatmul.f32.gmra.mxu0 %v293
        %v422 = vpop.f32.mrf.mxu0
        %v423 = vadd.f32 0.0, %v422
        %424 = vmatmul.f32.gmra.mxu0 %v296
        %v425 = vpop.f32.mrf.mxu0
        %v426 = vadd.f32 0.0, %v425
        %427 = vmatmul.f32.gmra.mxu0 %v299
        %v428 = vpop.f32.mrf.mxu0
        %v429 = vadd.f32 0.0, %v428
        %430 = vmatmul.f32.gmra.mxu0 %v302
        %v431 = vpop.f32.mrf.mxu0
        %v432 = vadd.f32 0.0, %v431
        %433 = vmatmul.f32.gmra.mxu0 %v305
        %v434 = vpop.f32.mrf.mxu0
        %v435 = vadd.f32 0.0, %v434
        %436 = vmatmul.f32.gmra.mxu0 %v308
        %v437 = vpop.f32.mrf.mxu0
        %v438 = vadd.f32 0.0, %v437
        %439 = vmatmul.f32.gmra.mxu0 %v311
        %v440 = vpop.f32.mrf.mxu0
        %v441 = vadd.f32 0.0, %v440
        %442 = vmatmul.f32.gmra.mxu0 %v314
        %v443 = vpop.f32.mrf.mxu0
        %v444 = vadd.f32 0.0, %v443
        %445 = vmatmul.f32.gmra.mxu0 %v317
        %v446 = vpop.f32.mrf.mxu0
        %v447 = vadd.f32 0.0, %v446
        %448 = vmatmul.f32.gmra.mxu0 %v320
        %v449 = vpop.f32.mrf.mxu0
        %v450 = vadd.f32 0.0, %v449
        %451 = vmatmul.f32.gmra.mxu0 %v323
        %v452 = vpop.f32.mrf.mxu0
        %v453 = vadd.f32 0.0, %v452
        %454 = vdwg.mxu0
        %vm471 = vcmask 1045504
        %v472 = vrot.slane %v408, 2
        %v473 = vrot.slane %v411, 2
        %v474 = vsel %vm471, %v472, %v473
        %v475 = vrot.slane %v414, 2
        %v476 = vsel %vm471, %v473, %v475
        %v477 = vrot.slane %v417, 2
        %v478 = vsel %vm471, %v475, %v477
        %v479 = vrot.slane %v420, 2
        %v480 = vrot.slane %v423, 2
        %v481 = vsel %vm471, %v479, %v480
        %v482 = vrot.slane %v426, 2
        %v483 = vsel %vm471, %v480, %v482
        %v484 = vrot.slane %v429, 2
        %v485 = vsel %vm471, %v482, %v484
        %v486 = vrot.slane %v432, 2
        %v487 = vrot.slane %v435, 2
        %v488 = vsel %vm471, %v486, %v487
        %v489 = vrot.slane %v438, 2
        %v490 = vsel %vm471, %v487, %v489
        %v491 = vrot.slane %v441, 2
        %v492 = vsel %vm471, %v489, %v491
        %v493 = vrot.slane %v444, 2
        %v494 = vrot.slane %v447, 2
        %v495 = vsel %vm471, %v493, %v494
        %v496 = vrot.slane %v450, 2
        %v497 = vsel %vm471, %v494, %v496
        %v498 = vrot.slane %v453, 2
        %v499 = vsel %vm471, %v496, %v498
        %v516 = vadd.f32 %v343, %v474
        %v517 = vadd.f32 %v346, %v476
        %v518 = vadd.f32 %v349, %v478
        %v519 = vadd.f32 %v352, %v477
        %v520 = vadd.f32 %v355, %v481
        %v521 = vadd.f32 %v358, %v483
        %v522 = vadd.f32 %v361, %v485
        %v523 = vadd.f32 %v364, %v484
        %v524 = vadd.f32 %v367, %v488
        %v525 = vadd.f32 %v370, %v490
        %v526 = vadd.f32 %v373, %v492
        %v527 = vadd.f32 %v376, %v491
        %v528 = vadd.f32 %v379, %v495
        %v529 = vadd.f32 %v382, %v497
        %v530 = vadd.f32 %v385, %v499
        %v531 = vadd.f32 %v388, %v498
        %v532 = vld [vmem:[%s2] sm:$0x1]
        %v534 = vperm.slane %v532, 0
        %v536 = vadd.f32 %v516, %v534
        %v537 = vadd.f32 %v517, %v534
        %v538 = vadd.f32 %v518, %v534
        %v539 = vadd.f32 %v519, %v534
        %v540 = vadd.f32 %v520, %v534
        %v541 = vadd.f32 %v521, %v534
        %v542 = vadd.f32 %v522, %v534
        %v543 = vadd.f32 %v523, %v534
        %v544 = vadd.f32 %v524, %v534
        %v545 = vadd.f32 %v525, %v534
        %v546 = vadd.f32 %v526, %v534
        %v547 = vadd.f32 %v527, %v534
        %v548 = vadd.f32 %v528, %v534
        %v549 = vadd.f32 %v529, %v534
        %v550 = vadd.f32 %v530, %v534
        %v551 = vadd.f32 %v531, %v534
        %v552 = vtanh.pop %v536
        %v553 = vtanh.pop %v537
        %v554 = vtanh.pop %v538
        %v555 = vtanh.pop %v539
        %v556 = vtanh.pop %v540
        %v557 = vtanh.pop %v541
        %v558 = vtanh.pop %v542
        %v559 = vtanh.pop %v543
        %v560 = vtanh.pop %v544
        %v561 = vtanh.pop %v545
        %v562 = vtanh.pop %v546
        %v563 = vtanh.pop %v547
        %v564 = vtanh.pop %v548
        %v565 = vtanh.pop %v549
        %v566 = vtanh.pop %v550
        %v567 = vtanh.pop %v551
        %v568 = vxor.u32 %v536, 2147483648
        %v569 = vxor.u32 %v537, 2147483648
        %v570 = vxor.u32 %v538, 2147483648
        %v571 = vxor.u32 %v539, 2147483648
        %v572 = vxor.u32 %v540, 2147483648
        %v573 = vxor.u32 %v541, 2147483648
        %v574 = vxor.u32 %v542, 2147483648
        %v575 = vxor.u32 %v543, 2147483648
        %v576 = vxor.u32 %v544, 2147483648
        %v577 = vxor.u32 %v545, 2147483648
        %v578 = vxor.u32 %v546, 2147483648
        %v579 = vxor.u32 %v547, 2147483648
        %v580 = vxor.u32 %v548, 2147483648
        %v581 = vxor.u32 %v549, 2147483648
        %v582 = vxor.u32 %v550, 2147483648
        %v583 = vxor.u32 %v551, 2147483648
        %v584 = vmul.f32 %v568, 1.442695
        %v585 = vpow.pop %v584
        %v586 = vmul.f32 %v569, 1.442695
        %v587 = vpow.pop %v586
        %v588 = vmul.f32 %v570, 1.442695
        %v589 = vpow.pop %v588
        %v590 = vmul.f32 %v571, 1.442695
        %v591 = vpow.pop %v590
        %v592 = vmul.f32 %v572, 1.442695
        %v593 = vpow.pop %v592
        %v594 = vmul.f32 %v573, 1.442695
        %v595 = vpow.pop %v594
        %v596 = vmul.f32 %v574, 1.442695
        %v597 = vpow.pop %v596
        %v598 = vmul.f32 %v575, 1.442695
        %v599 = vpow.pop %v598
        %v600 = vmul.f32 %v576, 1.442695
        %v601 = vpow.pop %v600
        %v602 = vmul.f32 %v577, 1.442695
        %v603 = vpow.pop %v602
        %v604 = vmul.f32 %v578, 1.442695
        %v605 = vpow.pop %v604
        %v606 = vmul.f32 %v579, 1.442695
        %v607 = vpow.pop %v606
        %v608 = vmul.f32 %v580, 1.442695
        %v609 = vpow.pop %v608
        %v610 = vmul.f32 %v581, 1.442695
        %v611 = vpow.pop %v610
        %v612 = vmul.f32 %v582, 1.442695
        %v613 = vpow.pop %v612
        %v614 = vmul.f32 %v583, 1.442695
        %v615 = vpow.pop %v614
        %v616 = vadd.f32 %v585, 1.0
        %v617 = vadd.f32 %v587, 1.0
        %v618 = vadd.f32 %v589, 1.0
        %v619 = vadd.f32 %v591, 1.0
        %v620 = vadd.f32 %v593, 1.0
        %v621 = vadd.f32 %v595, 1.0
        %v622 = vadd.f32 %v597, 1.0
        %v623 = vadd.f32 %v599, 1.0
        %v624 = vadd.f32 %v601, 1.0
        %v625 = vadd.f32 %v603, 1.0
        %v626 = vadd.f32 %v605, 1.0
        %v627 = vadd.f32 %v607, 1.0
        %v628 = vadd.f32 %v609, 1.0
        %v629 = vadd.f32 %v611, 1.0
        %v630 = vadd.f32 %v613, 1.0
        %v631 = vadd.f32 %v615, 1.0
        %v632 = vrcp.pop %v616
        %v633 = vmul.f32 %v616, %v632
        %v634 = vsub.f32 1.0, %v633
        %v635 = vmul.f32 %v632, %v634
        %v636 = vadd.f32 %v632, %v635
        %vm637 = vweird.f32 %v616
        %vm638 = vweird.f32 %v632
        %vm639 = vmor %vm637, %vm638
        %v640 = vsel %vm639, %v632, %v636
        %v641 = vand.u32 2147483647, %v616
        %vm642 = vcmp.eq.f32.partialorder %v641, 8.507059e+37
        %v643 = vand.u32 %v616, 2147483648
        %v644 = vor.u32 1.1754944e-38, %v643
        %v645 = vsel %vm642, %v644, %v640
        %v646 = vmul.f32 1.0, %v645
        %v647 = vrcp.pop %v617
        %v648 = vmul.f32 %v617, %v647
        %v649 = vsub.f32 1.0, %v648
        %v650 = vmul.f32 %v647, %v649
        %v651 = vadd.f32 %v647, %v650
        %vm652 = vweird.f32 %v617
        %vm653 = vweird.f32 %v647
        %vm654 = vmor %vm652, %vm653
        %v655 = vsel %vm654, %v647, %v651
        %v656 = vand.u32 2147483647, %v617
        %vm657 = vcmp.eq.f32.partialorder %v656, 8.507059e+37
        %v658 = vand.u32 %v617, 2147483648
        %v659 = vor.u32 1.1754944e-38, %v658
        %v660 = vsel %vm657, %v659, %v655
        %v661 = vmul.f32 1.0, %v660
        %v662 = vrcp.pop %v618
        %v663 = vmul.f32 %v618, %v662
        %v664 = vsub.f32 1.0, %v663
        %v665 = vmul.f32 %v662, %v664
        %v666 = vadd.f32 %v662, %v665
        %vm667 = vweird.f32 %v618
        %vm668 = vweird.f32 %v662
        %vm669 = vmor %vm667, %vm668
        %v670 = vsel %vm669, %v662, %v666
        %v671 = vand.u32 2147483647, %v618
        %vm672 = vcmp.eq.f32.partialorder %v671, 8.507059e+37
        %v673 = vand.u32 %v618, 2147483648
        %v674 = vor.u32 1.1754944e-38, %v673
        %v675 = vsel %vm672, %v674, %v670
        %v676 = vmul.f32 1.0, %v675
        %v677 = vrcp.pop %v619
        %v678 = vmul.f32 %v619, %v677
        %v679 = vsub.f32 1.0, %v678
        %v680 = vmul.f32 %v677, %v679
        %v681 = vadd.f32 %v677, %v680
        %vm682 = vweird.f32 %v619
        %vm683 = vweird.f32 %v677
        %vm684 = vmor %vm682, %vm683
        %v685 = vsel %vm684, %v677, %v681
        %v686 = vand.u32 2147483647, %v619
        %vm687 = vcmp.eq.f32.partialorder %v686, 8.507059e+37
        %v688 = vand.u32 %v619, 2147483648
        %v689 = vor.u32 1.1754944e-38, %v688
        %v690 = vsel %vm687, %v689, %v685
        %v691 = vmul.f32 1.0, %v690
        %v692 = vrcp.pop %v620
        %v693 = vmul.f32 %v620, %v692
        %v694 = vsub.f32 1.0, %v693
        %v695 = vmul.f32 %v692, %v694
        %v696 = vadd.f32 %v692, %v695
        %vm697 = vweird.f32 %v620
        %vm698 = vweird.f32 %v692
        %vm699 = vmor %vm697, %vm698
        %v700 = vsel %vm699, %v692, %v696
        %v701 = vand.u32 2147483647, %v620
        %vm702 = vcmp.eq.f32.partialorder %v701, 8.507059e+37
        %v703 = vand.u32 %v620, 2147483648
        %v704 = vor.u32 1.1754944e-38, %v703
        %v705 = vsel %vm702, %v704, %v700
        %v706 = vmul.f32 1.0, %v705
        %v707 = vrcp.pop %v621
        %v708 = vmul.f32 %v621, %v707
        %v709 = vsub.f32 1.0, %v708
        %v710 = vmul.f32 %v707, %v709
        %v711 = vadd.f32 %v707, %v710
        %vm712 = vweird.f32 %v621
        %vm713 = vweird.f32 %v707
        %vm714 = vmor %vm712, %vm713
        %v715 = vsel %vm714, %v707, %v711
        %v716 = vand.u32 2147483647, %v621
        %vm717 = vcmp.eq.f32.partialorder %v716, 8.507059e+37
        %v718 = vand.u32 %v621, 2147483648
        %v719 = vor.u32 1.1754944e-38, %v718
        %v720 = vsel %vm717, %v719, %v715
        %v721 = vmul.f32 1.0, %v720
        %v722 = vrcp.pop %v622
        %v723 = vmul.f32 %v622, %v722
        %v724 = vsub.f32 1.0, %v723
        %v725 = vmul.f32 %v722, %v724
        %v726 = vadd.f32 %v722, %v725
        %vm727 = vweird.f32 %v622
        %vm728 = vweird.f32 %v722
        %vm729 = vmor %vm727, %vm728
        %v730 = vsel %vm729, %v722, %v726
        %v731 = vand.u32 2147483647, %v622
        %vm732 = vcmp.eq.f32.partialorder %v731, 8.507059e+37
        %v733 = vand.u32 %v622, 2147483648
        %v734 = vor.u32 1.1754944e-38, %v733
        %v735 = vsel %vm732, %v734, %v730
        %v736 = vmul.f32 1.0, %v735
        %v737 = vrcp.pop %v623
        %v738 = vmul.f32 %v623, %v737
        %v739 = vsub.f32 1.0, %v738
        %v740 = vmul.f32 %v737, %v739
        %v741 = vadd.f32 %v737, %v740
        %vm742 = vweird.f32 %v623
        %vm743 = vweird.f32 %v737
        %vm744 = vmor %vm742, %vm743
        %v745 = vsel %vm744, %v737, %v741
        %v746 = vand.u32 2147483647, %v623
        %vm747 = vcmp.eq.f32.partialorder %v746, 8.507059e+37
        %v748 = vand.u32 %v623, 2147483648
        %v749 = vor.u32 1.1754944e-38, %v748
        %v750 = vsel %vm747, %v749, %v745
        %v751 = vmul.f32 1.0, %v750
        %v752 = vrcp.pop %v624
        %v753 = vmul.f32 %v624, %v752
        %v754 = vsub.f32 1.0, %v753
        %v755 = vmul.f32 %v752, %v754
        %v756 = vadd.f32 %v752, %v755
        %vm757 = vweird.f32 %v624
        %vm758 = vweird.f32 %v752
        %vm759 = vmor %vm757, %vm758
        %v760 = vsel %vm759, %v752, %v756
        %v761 = vand.u32 2147483647, %v624
        %vm762 = vcmp.eq.f32.partialorder %v761, 8.507059e+37
        %v763 = vand.u32 %v624, 2147483648
        %v764 = vor.u32 1.1754944e-38, %v763
        %v765 = vsel %vm762, %v764, %v760
        %v766 = vmul.f32 1.0, %v765
        %v767 = vrcp.pop %v625
        %v768 = vmul.f32 %v625, %v767
        %v769 = vsub.f32 1.0, %v768
        %v770 = vmul.f32 %v767, %v769
        %v771 = vadd.f32 %v767, %v770
        %vm772 = vweird.f32 %v625
        %vm773 = vweird.f32 %v767
        %vm774 = vmor %vm772, %vm773
        %v775 = vsel %vm774, %v767, %v771
        %v776 = vand.u32 2147483647, %v625
        %vm777 = vcmp.eq.f32.partialorder %v776, 8.507059e+37
        %v778 = vand.u32 %v625, 2147483648
        %v779 = vor.u32 1.1754944e-38, %v778
        %v780 = vsel %vm777, %v779, %v775
        %v781 = vmul.f32 1.0, %v780
        %v782 = vrcp.pop %v626
        %v783 = vmul.f32 %v626, %v782
        %v784 = vsub.f32 1.0, %v783
        %v785 = vmul.f32 %v782, %v784
        %v786 = vadd.f32 %v782, %v785
        %vm787 = vweird.f32 %v626
        %vm788 = vweird.f32 %v782
        %vm789 = vmor %vm787, %vm788
        %v790 = vsel %vm789, %v782, %v786
        %v791 = vand.u32 2147483647, %v626
        %vm792 = vcmp.eq.f32.partialorder %v791, 8.507059e+37
        %v793 = vand.u32 %v626, 2147483648
        %v794 = vor.u32 1.1754944e-38, %v793
        %v795 = vsel %vm792, %v794, %v790
        %v796 = vmul.f32 1.0, %v795
        %v797 = vrcp.pop %v627
        %v798 = vmul.f32 %v627, %v797
        %v799 = vsub.f32 1.0, %v798
        %v800 = vmul.f32 %v797, %v799
        %v801 = vadd.f32 %v797, %v800
        %vm802 = vweird.f32 %v627
        %vm803 = vweird.f32 %v797
        %vm804 = vmor %vm802, %vm803
        %v805 = vsel %vm804, %v797, %v801
        %v806 = vand.u32 2147483647, %v627
        %vm807 = vcmp.eq.f32.partialorder %v806, 8.507059e+37
        %v808 = vand.u32 %v627, 2147483648
        %v809 = vor.u32 1.1754944e-38, %v808
        %v810 = vsel %vm807, %v809, %v805
        %v811 = vmul.f32 1.0, %v810
        %v812 = vrcp.pop %v628
        %v813 = vmul.f32 %v628, %v812
        %v814 = vsub.f32 1.0, %v813
        %v815 = vmul.f32 %v812, %v814
        %v816 = vadd.f32 %v812, %v815
        %vm817 = vweird.f32 %v628
        %vm818 = vweird.f32 %v812
        %vm819 = vmor %vm817, %vm818
        %v820 = vsel %vm819, %v812, %v816
        %v821 = vand.u32 2147483647, %v628
        %vm822 = vcmp.eq.f32.partialorder %v821, 8.507059e+37
        %v823 = vand.u32 %v628, 2147483648
        %v824 = vor.u32 1.1754944e-38, %v823
        %v825 = vsel %vm822, %v824, %v820
        %v826 = vmul.f32 1.0, %v825
        %v827 = vrcp.pop %v629
        %v828 = vmul.f32 %v629, %v827
        %v829 = vsub.f32 1.0, %v828
        %v830 = vmul.f32 %v827, %v829
        %v831 = vadd.f32 %v827, %v830
        %vm832 = vweird.f32 %v629
        %vm833 = vweird.f32 %v827
        %vm834 = vmor %vm832, %vm833
        %v835 = vsel %vm834, %v827, %v831
        %v836 = vand.u32 2147483647, %v629
        %vm837 = vcmp.eq.f32.partialorder %v836, 8.507059e+37
        %v838 = vand.u32 %v629, 2147483648
        %v839 = vor.u32 1.1754944e-38, %v838
        %v840 = vsel %vm837, %v839, %v835
        %v841 = vmul.f32 1.0, %v840
        %v842 = vrcp.pop %v630
        %v843 = vmul.f32 %v630, %v842
        %v844 = vsub.f32 1.0, %v843
        %v845 = vmul.f32 %v842, %v844
        %v846 = vadd.f32 %v842, %v845
        %vm847 = vweird.f32 %v630
        %vm848 = vweird.f32 %v842
        %vm849 = vmor %vm847, %vm848
        %v850 = vsel %vm849, %v842, %v846
        %v851 = vand.u32 2147483647, %v630
        %vm852 = vcmp.eq.f32.partialorder %v851, 8.507059e+37
        %v853 = vand.u32 %v630, 2147483648
        %v854 = vor.u32 1.1754944e-38, %v853
        %v855 = vsel %vm852, %v854, %v850
        %v856 = vmul.f32 1.0, %v855
        %v857 = vrcp.pop %v631
        %v858 = vmul.f32 %v631, %v857
        %v859 = vsub.f32 1.0, %v858
        %v860 = vmul.f32 %v857, %v859
        %v861 = vadd.f32 %v857, %v860
        %vm862 = vweird.f32 %v631
        %vm863 = vweird.f32 %v857
        %vm864 = vmor %vm862, %vm863
        %v865 = vsel %vm864, %v857, %v861
        %v866 = vand.u32 2147483647, %v631
        %vm867 = vcmp.eq.f32.partialorder %v866, 8.507059e+37
        %v868 = vand.u32 %v631, 2147483648
        %v869 = vor.u32 1.1754944e-38, %v868
        %v870 = vsel %vm867, %v869, %v865
        %v871 = vmul.f32 1.0, %v870
        %888 = vrot.lane.b32.xlu0 %v646, 64
        %v889 = vpop.permute.xlu0 %888
        %890 = vrot.lane.b32.xlu0 %v661, 64
        %v891 = vpop.permute.xlu0 %890
        %892 = vrot.lane.b32.xlu0 %v676, 64
        %v893 = vpop.permute.xlu0 %892
        %894 = vrot.lane.b32.xlu0 %v691, 64
        %v895 = vpop.permute.xlu0 %894
        %896 = vrot.lane.b32.xlu0 %v706, 64
        %v897 = vpop.permute.xlu0 %896
        %898 = vrot.lane.b32.xlu0 %v721, 64
        %v899 = vpop.permute.xlu0 %898
        %900 = vrot.lane.b32.xlu0 %v736, 64
        %v901 = vpop.permute.xlu0 %900
        %902 = vrot.lane.b32.xlu0 %v751, 64
        %v903 = vpop.permute.xlu0 %902
        %904 = vrot.lane.b32.xlu0 %v766, 64
        %v905 = vpop.permute.xlu0 %904
        %906 = vrot.lane.b32.xlu0 %v781, 64
        %v907 = vpop.permute.xlu0 %906
        %908 = vrot.lane.b32.xlu0 %v796, 64
        %v909 = vpop.permute.xlu0 %908
        %910 = vrot.lane.b32.xlu0 %v811, 64
        %v911 = vpop.permute.xlu0 %910
        %912 = vrot.lane.b32.xlu0 %v826, 64
        %v913 = vpop.permute.xlu0 %912
        %914 = vrot.lane.b32.xlu0 %v841, 64
        %v915 = vpop.permute.xlu0 %914
        %916 = vrot.lane.b32.xlu0 %v856, 64
        %v917 = vpop.permute.xlu0 %916
        %918 = vrot.lane.b32.xlu0 %v871, 64
        %v919 = vpop.permute.xlu0 %918
        %v936 = vmul.f32 %v552, %v889
        %v937 = vmul.f32 %v553, %v891
        %v938 = vmul.f32 %v554, %v893
        %v939 = vmul.f32 %v555, %v895
        %v940 = vmul.f32 %v556, %v897
        %v941 = vmul.f32 %v557, %v899
        %v942 = vmul.f32 %v558, %v901
        %v943 = vmul.f32 %v559, %v903
        %v944 = vmul.f32 %v560, %v905
        %v945 = vmul.f32 %v561, %v907
        %v946 = vmul.f32 %v562, %v909
        %v947 = vmul.f32 %v563, %v911
        %v948 = vmul.f32 %v564, %v913
        %v949 = vmul.f32 %v565, %v915
        %v950 = vmul.f32 %v566, %v917
        %v951 = vmul.f32 %v567, %v919
        %v968 = vrot.slane %v936, 2
        %v969 = vrot.slane %v936, 4
        %v970 = vrot.slane %v936, 6
        %v971 = vrot.slane %v937, 2
        %v972 = vrot.slane %v937, 4
        %v973 = vrot.slane %v937, 6
        %v974 = vrot.slane %v938, 2
        %v975 = vrot.slane %v938, 4
        %v976 = vrot.slane %v938, 6
        %v977 = vrot.slane %v939, 2
        %v978 = vrot.slane %v939, 4
        %v979 = vrot.slane %v940, 2
        %v980 = vrot.slane %v940, 4
        %v981 = vrot.slane %v940, 6
        %v982 = vrot.slane %v941, 2
        %v983 = vrot.slane %v941, 4
        %v984 = vrot.slane %v941, 6
        %v985 = vrot.slane %v942, 2
        %v986 = vrot.slane %v942, 4
        %v987 = vrot.slane %v942, 6
        %v988 = vrot.slane %v943, 2
        %v989 = vrot.slane %v943, 4
        %v990 = vrot.slane %v944, 2
        %v991 = vrot.slane %v944, 4
        %v992 = vrot.slane %v944, 6
        %v993 = vrot.slane %v945, 2
        %v994 = vrot.slane %v945, 4
        %v995 = vrot.slane %v945, 6
        %v996 = vrot.slane %v946, 2
        %v997 = vrot.slane %v946, 4
        %v998 = vrot.slane %v946, 6
        %v999 = vrot.slane %v947, 2
        %v1000 = vrot.slane %v947, 4
        %v1001 = vrot.slane %v948, 2
        %v1002 = vrot.slane %v948, 4
        %v1003 = vrot.slane %v948, 6
        %v1004 = vrot.slane %v949, 2
        %v1005 = vrot.slane %v949, 4
        %v1006 = vrot.slane %v949, 6
        %v1007 = vrot.slane %v950, 2
        %v1008 = vrot.slane %v950, 4
        %v1009 = vrot.slane %v950, 6
        %v1010 = vrot.slane %v951, 2
        %v1011 = vrot.slane %v951, 4
        %v1012 = vld [vmem:[%s3] sm:$0xff]
        %v1013 = vld [vmem:[%s3 + $0x8] sm:$0xff]
        %v1014 = vld [vmem:[%s3 + $0x10] sm:$0xff]
        %v1015 = vld [vmem:[%s3 + $0x18] sm:$0xff]
        %v1016 = vld [vmem:[%s3 + $0x20] sm:$0xff]
        %v1017 = vld [vmem:[%s3 + $0x28] sm:$0xff]
        %v1018 = vld [vmem:[%s3 + $0x30] sm:$0xff]
        %v1019 = vld [vmem:[%s3 + $0x38] sm:$0xff]
        %v1020 = vld [vmem:[%s4] sm:$0x1]
        %v1022 = vperm.slane %v1020, 0
        %1024 = vst [vmem:[#allocation1] ss:$4 sm:$0xff] %v936
        %s1025 = scalar_lea.vmem [#allocation1], 1
        %1026 = vst [vmem:[%s1025] ss:$4 sm:$0xff] %v968
        %s1027 = scalar_lea.vmem [#allocation1], 2
        %1028 = vst [vmem:[%s1027] ss:$4 sm:$0xff] %v969
        %s1029 = scalar_lea.vmem [#allocation1], 3
        %1030 = vst [vmem:[%s1029] ss:$4 sm:$0xff] %v970
        %s1031 = scalar_lea.vmem [#allocation1], 32
        %1032 = vst [vmem:[%s1031] ss:$4 sm:$0xff] %v937
        %s1033 = scalar_lea.vmem [#allocation1], 33
        %1034 = vst [vmem:[%s1033] ss:$4 sm:$0xff] %v971
        %s1035 = scalar_lea.vmem [#allocation1], 34
        %1036 = vst [vmem:[%s1035] ss:$4 sm:$0xff] %v972
        %s1037 = scalar_lea.vmem [#allocation1], 35
        %1038 = vst [vmem:[%s1037] ss:$4 sm:$0xff] %v973
        %v1039 = vld.sshfl [vmem:[#allocation1] sm:$0xff pattern:$0x73625140]
        %v1040 = vld.sshfl [vmem:[#allocation1 + $0x20] sm:$0xff pattern:$0x73625140]
        %1041 = vst [vmem:[#allocation1] ss:$4 sm:$0xff] %v938
        %1042 = vst [vmem:[%s1025] ss:$4 sm:$0xff] %v974
        %1043 = vst [vmem:[%s1027] ss:$4 sm:$0xff] %v975
        %1044 = vst [vmem:[%s1029] ss:$4 sm:$0xff] %v976
        %1045 = vst [vmem:[%s1031] ss:$4 sm:$0xff] %v939
        %1046 = vst [vmem:[%s1033] ss:$4 sm:$0xff] %v977
        %1047 = vst [vmem:[%s1035] ss:$4 sm:$0xff] %v978
        %1048 = vst [vmem:[%s1037] ss:$4 sm:$0xff] %v940
        %v1049 = vld.sshfl [vmem:[#allocation1] sm:$0xff pattern:$0x73625140]
        %v1050 = vld.sshfl [vmem:[#allocation1 + $0x20] sm:$0xff pattern:$0x73625140]
        %1051 = vst [vmem:[#allocation1] ss:$4 sm:$0xff] %v979
        %1052 = vst [vmem:[%s1025] ss:$4 sm:$0xff] %v980
        %1053 = vst [vmem:[%s1027] ss:$4 sm:$0xff] %v981
        %1054 = vst [vmem:[%s1029] ss:$4 sm:$0xff] %v941
        %1055 = vst [vmem:[%s1031] ss:$4 sm:$0xff] %v982
        %1056 = vst [vmem:[%s1033] ss:$4 sm:$0xff] %v983
        %1057 = vst [vmem:[%s1035] ss:$4 sm:$0xff] %v984
        %1058 = vst [vmem:[%s1037] ss:$4 sm:$0xff] %v942
        %v1059 = vld.sshfl [vmem:[#allocation1] sm:$0xff pattern:$0x73625140]
        %v1060 = vld.sshfl [vmem:[#allocation1 + $0x20] sm:$0xff pattern:$0x73625140]
        %1061 = vst [vmem:[#allocation1] ss:$4 sm:$0xff] %v985
        %1062 = vst [vmem:[%s1025] ss:$4 sm:$0xff] %v986
        %1063 = vst [vmem:[%s1027] ss:$4 sm:$0xff] %v987
        %1064 = vst [vmem:[%s1029] ss:$4 sm:$0xff] %v943
        %1065 = vst [vmem:[%s1031] ss:$4 sm:$0xff] %v988
        %1066 = vst [vmem:[%s1033] ss:$4 sm:$0xff] %v989
        %1067 = vst [vmem:[%s1035] ss:$4 sm:$0xff] %v944
        %1068 = vst [vmem:[%s1037] ss:$4 sm:$0xff] %v990
        %v1069 = vld.sshfl [vmem:[#allocation1] sm:$0xff pattern:$0x73625140]
        %v1070 = vld.sshfl [vmem:[#allocation1 + $0x20] sm:$0xff pattern:$0x73625140]
        %1071 = vst [vmem:[#allocation1] ss:$4 sm:$0xff] %v991
        %1072 = vst [vmem:[%s1025] ss:$4 sm:$0xff] %v992
        %1073 = vst [vmem:[%s1027] ss:$4 sm:$0xff] %v945
        %1074 = vst [vmem:[%s1029] ss:$4 sm:$0xff] %v993
        %1075 = vst [vmem:[%s1031] ss:$4 sm:$0xff] %v994
        %1076 = vst [vmem:[%s1033] ss:$4 sm:$0xff] %v995
        %1077 = vst [vmem:[%s1035] ss:$4 sm:$0xff] %v946
        %1078 = vst [vmem:[%s1037] ss:$4 sm:$0xff] %v996
        %v1079 = vld.sshfl [vmem:[#allocation1] sm:$0xff pattern:$0x73625140]
        %v1080 = vld.sshfl [vmem:[#allocation1 + $0x20] sm:$0xff pattern:$0x73625140]
        %1081 = vst [vmem:[#allocation1] ss:$4 sm:$0xff] %v997
        %1082 = vst [vmem:[%s1025] ss:$4 sm:$0xff] %v998
        %1083 = vst [vmem:[%s1027] ss:$4 sm:$0xff] %v947
        %1084 = vst [vmem:[%s1029] ss:$4 sm:$0xff] %v999
        %1085 = vst [vmem:[%s1031] ss:$4 sm:$0xff] %v1000
        %1086 = vst [vmem:[%s1033] ss:$4 sm:$0xff] %v948
        %1087 = vst [vmem:[%s1035] ss:$4 sm:$0xff] %v1001
        %1088 = vst [vmem:[%s1037] ss:$4 sm:$0xff] %v1002
        %v1089 = vld.sshfl [vmem:[#allocation1] sm:$0xff pattern:$0x73625140]
        %v1090 = vld.sshfl [vmem:[#allocation1 + $0x20] sm:$0xff pattern:$0x73625140]
        %1091 = vst [vmem:[#allocation1] ss:$4 sm:$0xff] %v1003
        %1092 = vst [vmem:[%s1025] ss:$4 sm:$0xff] %v949
        %1093 = vst [vmem:[%s1027] ss:$4 sm:$0xff] %v1004
        %1094 = vst [vmem:[%s1029] ss:$4 sm:$0xff] %v1005
        %1095 = vst [vmem:[%s1031] ss:$4 sm:$0xff] %v1006
        %1096 = vst [vmem:[%s1033] ss:$4 sm:$0xff] %v950
        %1097 = vst [vmem:[%s1035] ss:$4 sm:$0xff] %v1007
        %1098 = vst [vmem:[%s1037] ss:$4 sm:$0xff] %v1008
        %v1099 = vld.sshfl [vmem:[#allocation1] sm:$0xff pattern:$0x73625140]
        %v1100 = vld.sshfl [vmem:[#allocation1 + $0x20] sm:$0xff pattern:$0x73625140]
        %1101 = vst [vmem:[#allocation1] ss:$4 sm:$0xff] %v1009
        %1102 = vst [vmem:[%s1025] ss:$4 sm:$0xff] %v951
        %1103 = vst [vmem:[%s1027] ss:$4 sm:$0xff] %v1010
        %1104 = vst [vmem:[%s1029] ss:$4 sm:$0xff] %v1011
        %v1105 = vld.sshfl [vmem:[#allocation1] sm:$0xff pattern:$0x73625140]
        %vm1106 = vcmask 523264
        %v1107 = vsel %vm1106, %v1039, 0
        %v1109 = vsel %vm1106, %v1040, 0
        %v1111 = vsel %vm1106, %v1049, 0
        %v1113 = vsel %vm1106, %v1050, 0
        %v1115 = vsel %vm1106, %v1059, 0
        %v1117 = vsel %vm1106, %v1060, 0
        %v1119 = vsel %vm1106, %v1069, 0
        %v1121 = vsel %vm1106, %v1070, 0
        %v1123 = vsel %vm1106, %v1079, 0
        %v1125 = vsel %vm1106, %v1080, 0
        %v1127 = vsel %vm1106, %v1089, 0
        %v1129 = vsel %vm1106, %v1090, 0
        %v1131 = vsel %vm1106, %v1099, 0
        %v1133 = vsel %vm1106, %v1100, 0
        %v1135 = vsel %vm1106, %v1105, 0
        %1137 = vmatpush.msra.mxu0 0.0
        %1138 = vmatpush.msra.mxu0 0.0
        %1139 = vmatpush.msra.mxu0 0.0
        %1140 = vmatpush.msra.mxu0 0.0
        %1141 = vmatpush.msra.mxu0 0.0
        %1142 = vmatpush.msra.mxu0 0.0
        %1143 = vmatpush.msra.mxu0 0.0
        %1144 = vmatpush.msra.mxu0 0.0
        %1145 = vmatpush.msra.mxu0 %v1019
        %1146 = vmatpush.msra.mxu0 %v1018
        %1147 = vmatpush.msra.mxu0 %v1017
        %1148 = vmatpush.msra.mxu0 %v1016
        %1149 = vmatpush.msra.mxu0 %v1015
        %1150 = vmatpush.msra.mxu0 %v1014
        %1151 = vmatpush.msra.mxu0 %v1013
        %1152 = vmatpush.msra.mxu0 %v1012
        %1153 = vmatmul.f32.gmra.mxu0 %v1107
        %v1154 = vpop.f32.mrf.mxu0
        %v1155 = vadd.f32 %v1022, %v1154
        %1156 = vmatmul.f32.gmra.mxu0 %v1109
        %v1157 = vpop.f32.mrf.mxu0
        %v1158 = vadd.f32 %v1022, %v1157
        %1159 = vmatmul.f32.gmra.mxu0 %v1111
        %v1160 = vpop.f32.mrf.mxu0
        %v1161 = vadd.f32 %v1022, %v1160
        %1162 = vmatmul.f32.gmra.mxu0 %v1113
        %v1163 = vpop.f32.mrf.mxu0
        %v1164 = vadd.f32 %v1022, %v1163
        %1165 = vmatmul.f32.gmra.mxu0 %v1115
        %v1166 = vpop.f32.mrf.mxu0
        %v1167 = vadd.f32 %v1022, %v1166
        %1168 = vmatmul.f32.gmra.mxu0 %v1117
        %v1169 = vpop.f32.mrf.mxu0
        %v1170 = vadd.f32 %v1022, %v1169
        %1171 = vmatmul.f32.gmra.mxu0 %v1119
        %v1172 = vpop.f32.mrf.mxu0
        %v1173 = vadd.f32 %v1022, %v1172
        %1174 = vmatmul.f32.gmra.mxu0 %v1121
        %v1175 = vpop.f32.mrf.mxu0
        %v1176 = vadd.f32 %v1022, %v1175
        %1177 = vmatmul.f32.gmra.mxu0 %v1123
        %v1178 = vpop.f32.mrf.mxu0
        %v1179 = vadd.f32 %v1022, %v1178
        %1180 = vmatmul.f32.gmra.mxu0 %v1125
        %v1181 = vpop.f32.mrf.mxu0
        %v1182 = vadd.f32 %v1022, %v1181
        %1183 = vmatmul.f32.gmra.mxu0 %v1127
        %v1184 = vpop.f32.mrf.mxu0
        %v1185 = vadd.f32 %v1022, %v1184
        %1186 = vmatmul.f32.gmra.mxu0 %v1129
        %v1187 = vpop.f32.mrf.mxu0
        %v1188 = vadd.f32 %v1022, %v1187
        %1189 = vmatmul.f32.gmra.mxu0 %v1131
        %v1190 = vpop.f32.mrf.mxu0
        %v1191 = vadd.f32 %v1022, %v1190
        %1192 = vmatmul.f32.gmra.mxu0 %v1133
        %v1193 = vpop.f32.mrf.mxu0
        %v1194 = vadd.f32 %v1022, %v1193
        %1195 = vmatmul.f32.gmra.mxu0 %v1135
        %v1196 = vpop.f32.mrf.mxu0
        %v1197 = vadd.f32 %v1022, %v1196
        %1198 = vdwg.mxu0
        %v1214 = vrot.slane %v1155, 2
        %v1215 = vrot.slane %v1155, 4
        %v1216 = vrot.slane %v1155, 6
        %v1217 = vrot.slane %v1158, 2
        %v1218 = vrot.slane %v1158, 4
        %v1219 = vrot.slane %v1158, 6
        %v1220 = vrot.slane %v1161, 2
        %v1221 = vrot.slane %v1161, 4
        %v1222 = vrot.slane %v1161, 6
        %v1223 = vrot.slane %v1164, 2
        %v1224 = vrot.slane %v1164, 4
        %v1225 = vrot.slane %v1164, 6
        %v1226 = vrot.slane %v1167, 2
        %v1227 = vrot.slane %v1167, 4
        %v1228 = vrot.slane %v1167, 6
        %v1229 = vrot.slane %v1170, 2
        %v1230 = vrot.slane %v1170, 4
        %v1231 = vrot.slane %v1170, 6
        %v1232 = vrot.slane %v1173, 2
        %v1233 = vrot.slane %v1173, 4
        %v1234 = vrot.slane %v1173, 6
        %v1235 = vrot.slane %v1176, 2
        %v1236 = vrot.slane %v1176, 4
        %v1237 = vrot.slane %v1176, 6
        %v1238 = vrot.slane %v1179, 2
        %v1239 = vrot.slane %v1179, 4
        %v1240 = vrot.slane %v1179, 6
        %v1241 = vrot.slane %v1182, 2
        %v1242 = vrot.slane %v1182, 4
        %v1243 = vrot.slane %v1182, 6
        %v1244 = vrot.slane %v1185, 2
        %v1245 = vrot.slane %v1185, 4
        %v1246 = vrot.slane %v1185, 6
        %v1247 = vrot.slane %v1188, 2
        %v1248 = vrot.slane %v1188, 4
        %v1249 = vrot.slane %v1188, 6
        %v1250 = vrot.slane %v1191, 2
        %v1251 = vrot.slane %v1191, 4
        %v1252 = vrot.slane %v1191, 6
        %v1253 = vrot.slane %v1194, 2
        %v1254 = vrot.slane %v1194, 4
        %v1255 = vrot.slane %v1194, 6
        %v1256 = vrot.slane %v1197, 2
        %v1257 = vrot.slane %v1197, 4
        %v1258 = vrot.slane %v1197, 6
        %1259 = vst [vmem:[#allocation1] ss:$4 sm:$0xff] %v1155
        %s1260 = scalar_lea.vmem [#allocation1], 1
        %1261 = vst [vmem:[%s1260] ss:$4 sm:$0xff] %v1214
        %s1262 = scalar_lea.vmem [#allocation1], 2
        %1263 = vst [vmem:[%s1262] ss:$4 sm:$0xff] %v1215
        %s1264 = scalar_lea.vmem [#allocation1], 3
        %1265 = vst [vmem:[%s1264] ss:$4 sm:$0xff] %v1216
        %s1266 = scalar_lea.vmem [#allocation1], 32
        %1267 = vst [vmem:[%s1266] ss:$4 sm:$0xff] %v1158
        %s1268 = scalar_lea.vmem [#allocation1], 33
        %1269 = vst [vmem:[%s1268] ss:$4 sm:$0xff] %v1217
        %s1270 = scalar_lea.vmem [#allocation1], 34
        %1271 = vst [vmem:[%s1270] ss:$4 sm:$0xff] %v1218
        %s1272 = scalar_lea.vmem [#allocation1], 35
        %1273 = vst [vmem:[%s1272] ss:$4 sm:$0xff] %v1219
        %v1274 = vld.sshfl [vmem:[#allocation1] sm:$0xff pattern:$0x73625140]
        %v1275 = vld.sshfl [vmem:[#allocation1 + $0x20] sm:$0xff pattern:$0x73625140]
        %1276 = vst [vmem:[#allocation1] ss:$4 sm:$0xff] %v1161
        %1277 = vst [vmem:[%s1260] ss:$4 sm:$0xff] %v1220
        %1278 = vst [vmem:[%s1262] ss:$4 sm:$0xff] %v1221
        %1279 = vst [vmem:[%s1264] ss:$4 sm:$0xff] %v1222
        %1280 = vst [vmem:[%s1266] ss:$4 sm:$0xff] %v1164
        %1281 = vst [vmem:[%s1268] ss:$4 sm:$0xff] %v1223
        %1282 = vst [vmem:[%s1270] ss:$4 sm:$0xff] %v1224
        %v1283 = vld.sshfl [vmem:[#allocation1] sm:$0xff pattern:$0x73625140]
        %v1284 = vld.sshfl [vmem:[#allocation1 + $0x20] sm:$0xff pattern:$0x73625140]
        %1285 = vst [vmem:[#allocation1] ss:$4 sm:$0xff] %v1225
        %1286 = vst [vmem:[%s1260] ss:$4 sm:$0xff] %v1167
        %1287 = vst [vmem:[%s1262] ss:$4 sm:$0xff] %v1226
        %1288 = vst [vmem:[%s1264] ss:$4 sm:$0xff] %v1227
        %1289 = vst [vmem:[%s1266] ss:$4 sm:$0xff] %v1228
        %1290 = vst [vmem:[%s1268] ss:$4 sm:$0xff] %v1170
        %1291 = vst [vmem:[%s1270] ss:$4 sm:$0xff] %v1229
        %1292 = vst [vmem:[%s1272] ss:$4 sm:$0xff] %v1230
        %v1293 = vld.sshfl [vmem:[#allocation1] sm:$0xff pattern:$0x73625140]
        %v1294 = vld.sshfl [vmem:[#allocation1 + $0x20] sm:$0xff pattern:$0x73625140]
        %1295 = vst [vmem:[#allocation1] ss:$4 sm:$0xff] %v1231
        %1296 = vst [vmem:[%s1260] ss:$4 sm:$0xff] %v1173
        %1297 = vst [vmem:[%s1262] ss:$4 sm:$0xff] %v1232
        %1298 = vst [vmem:[%s1264] ss:$4 sm:$0xff] %v1233
        %1299 = vst [vmem:[%s1266] ss:$4 sm:$0xff] %v1234
        %1300 = vst [vmem:[%s1268] ss:$4 sm:$0xff] %v1176
        %1301 = vst [vmem:[%s1270] ss:$4 sm:$0xff] %v1235
        %v1302 = vld.sshfl [vmem:[#allocation1] sm:$0xff pattern:$0x73625140]
        %v1303 = vld.sshfl [vmem:[#allocation1 + $0x20] sm:$0xff pattern:$0x73625140]
        %1304 = vst [vmem:[#allocation1] ss:$4 sm:$0xff] %v1236
        %1305 = vst [vmem:[%s1260] ss:$4 sm:$0xff] %v1237
        %1306 = vst [vmem:[%s1262] ss:$4 sm:$0xff] %v1179
        %1307 = vst [vmem:[%s1264] ss:$4 sm:$0xff] %v1238
        %1308 = vst [vmem:[%s1266] ss:$4 sm:$0xff] %v1239
        %1309 = vst [vmem:[%s1268] ss:$4 sm:$0xff] %v1240
        %1310 = vst [vmem:[%s1270] ss:$4 sm:$0xff] %v1182
        %1311 = vst [vmem:[%s1272] ss:$4 sm:$0xff] %v1241
        %v1312 = vld.sshfl [vmem:[#allocation1] sm:$0xff pattern:$0x73625140]
        %v1313 = vld.sshfl [vmem:[#allocation1 + $0x20] sm:$0xff pattern:$0x73625140]
        %1314 = vst [vmem:[#allocation1] ss:$4 sm:$0xff] %v1242
        %1315 = vst [vmem:[%s1260] ss:$4 sm:$0xff] %v1243
        %1316 = vst [vmem:[%s1262] ss:$4 sm:$0xff] %v1185
        %1317 = vst [vmem:[%s1264] ss:$4 sm:$0xff] %v1244
        %1318 = vst [vmem:[%s1266] ss:$4 sm:$0xff] %v1245
        %1319 = vst [vmem:[%s1268] ss:$4 sm:$0xff] %v1246
        %1320 = vst [vmem:[%s1270] ss:$4 sm:$0xff] %v1188
        %v1321 = vld.sshfl [vmem:[#allocation1] sm:$0xff pattern:$0x73625140]
        %v1322 = vld.sshfl [vmem:[#allocation1 + $0x20] sm:$0xff pattern:$0x73625140]
        %1323 = vst [vmem:[#allocation1] ss:$4 sm:$0xff] %v1247
        %1324 = vst [vmem:[%s1260] ss:$4 sm:$0xff] %v1248
        %1325 = vst [vmem:[%s1262] ss:$4 sm:$0xff] %v1249
        %1326 = vst [vmem:[%s1264] ss:$4 sm:$0xff] %v1191
        %1327 = vst [vmem:[%s1266] ss:$4 sm:$0xff] %v1250
        %1328 = vst [vmem:[%s1268] ss:$4 sm:$0xff] %v1251
        %1329 = vst [vmem:[%s1270] ss:$4 sm:$0xff] %v1252
        %1330 = vst [vmem:[%s1272] ss:$4 sm:$0xff] %v1194
        %v1331 = vld.sshfl [vmem:[#allocation1] sm:$0xff pattern:$0x73625140]
        %v1332 = vld.sshfl [vmem:[#allocation1 + $0x20] sm:$0xff pattern:$0x73625140]
        %1333 = vst [vmem:[#allocation1] ss:$4 sm:$0xff] %v1253
        %1334 = vst [vmem:[%s1260] ss:$4 sm:$0xff] %v1254
        %1335 = vst [vmem:[%s1262] ss:$4 sm:$0xff] %v1255
        %1336 = vst [vmem:[%s1264] ss:$4 sm:$0xff] %v1197
        %1337 = vst [vmem:[%s1266] ss:$4 sm:$0xff] %v1256
        %1338 = vst [vmem:[%s1268] ss:$4 sm:$0xff] %v1257
        %1339 = vst [vmem:[%s1270] ss:$4 sm:$0xff] %v1258
        %v1340 = vld.sshfl [vmem:[#allocation1] sm:$0xff pattern:$0x73625140]
        %v1341 = vld.sshfl [vmem:[#allocation1 + $0x20] sm:$0xff pattern:$0x73625140]
        %1358 = vst.msk [vmem:[%s250] sm:$0xff] %vm276, %v1274
        %1359 = vst.msk [vmem:[%s250 + $0x8] sm:$0xff] %vm276, %v1275
        %1360 = vst.msk [vmem:[%s250 + $0x10] sm:$0xff] %vm276, %v1283
        %vm1361 = vcmask 259072
        %1362 = vst.msk [vmem:[%s250 + $0x18] sm:$0x3f] %vm1361, %v1284
        %1363 = vst.msk [vmem:[%s250 + $0x20] sm:$0xff] %vm276, %v1293
        %1364 = vst.msk [vmem:[%s250 + $0x28] sm:$0xff] %vm276, %v1294
        %1365 = vst.msk [vmem:[%s250 + $0x30] sm:$0xff] %vm276, %v1302
        %1366 = vst.msk [vmem:[%s250 + $0x38] sm:$0x3f] %vm1361, %v1303
        %1367 = vst.msk [vmem:[%s250 + $0x40] sm:$0xff] %vm276, %v1312
        %1368 = vst.msk [vmem:[%s250 + $0x48] sm:$0xff] %vm276, %v1313
        %1369 = vst.msk [vmem:[%s250 + $0x50] sm:$0xff] %vm276, %v1321
        %1370 = vst.msk [vmem:[%s250 + $0x58] sm:$0x3f] %vm1361, %v1322
        %1371 = vst.msk [vmem:[%s250 + $0x60] sm:$0xff] %vm276, %v1331
        %1372 = vst.msk [vmem:[%s250 + $0x68] sm:$0xff] %vm276, %v1332
        %1373 = vst.msk [vmem:[%s250 + $0x70] sm:$0xff] %vm276, %v1340
        %1374 = vst.msk [vmem:[%s250 + $0x78] sm:$0x3f] %vm1361, %v1341
        %s1375 = smul.u32 4, %s19
        %p1376 = scmp.lt.s32.totalorder %s1375, 7
        %s1377 = scalar_select %p1376, %s1375, 7
        %s1378 = smul.addr %s1377, 4
        %s1379 = smul.addr %s1378, 8
        %s1380 = scalar_lea.vmem %s5, %s1379
        // Predicated region
        $region45: #{tpu_custom_call.1} parent=39 // pred_check
          %p1381 = pneg %p147
        $region46: #{tpu_custom_call.1} parent=39 // pred_check_branch
          %1383 = sbr.rel (%p1381) target = $region48
        $region47: #{tpu_custom_call.1} parent=39 // pred_region
          %s1384 = smul.u32 4, %s19
        $region48: #{tpu_custom_call.1} parent=39 // pred_fallthru
          _
      $region40: #{tpu_custom_call.1} parent=5 // pred_fallthru
        _
      %p1385 = scmp.le.s32.totalorder 2, %s14
      // Predicated region
      $region49: #{tpu_custom_call.1} parent=5 // pred_check
        %p1386 = pneg %p1385
      $region50: #{tpu_custom_call.1} parent=5 // pred_check_branch
        %1388 = sbr.rel (%p1386) target = $region52
      $region51: #{tpu_custom_call.1} parent=5 // pred_region
        %s1389 = ssub.s32 %s14, 2
        // Predicated region
        $region53: #{tpu_custom_call.1} parent=51 // pred_check
          %p1390 = pneg %p153
        $region54: #{tpu_custom_call.1} parent=51 // pred_check_branch
          %1392 = sbr.rel (%p1390) target = $region56
        $region55: #{tpu_custom_call.1} parent=51 // pred_region
          %s1393 = smul.u32 4, %s20
          %p1394 = scmp.lt.s32.totalorder %s1393, 7
          %s1395 = scalar_select %p1394, %s1393, 7
          %s1396 = smul.addr %s1395, 4
          %s1397 = smul.addr %s1396, 8
          %s1398 = scalar_lea.vmem %s5, %s1397
        $region56: #{tpu_custom_call.1} parent=51 // pred_fallthru
          _
      $region52: #{tpu_custom_call.1} parent=5 // pred_fallthru
        _
    $region6: #{tpu_custom_call.1} parent=1 // loop_footer
      %s18 = sadd.s32 1, %s14
    $region7: #{tpu_custom_call.1} parent=1 // loop_footer_branch
      %13 = sbr.rel target = $region3
    $region8: #{tpu_custom_call.1} parent=1 // loop_exit
      _
    %1399 = vsyncpa [#allocation3], 1
    %s1400 = scalar_lea.sflag [#allocation3], 1
    %1401 = vsyncpa %s1400, 1

</llo_original>
